<compile_context>
chip_gen: v7x
topology: tpu7x:2x2x1
jax: 0.10.0
libtpu: 0.0.40
codegen_flags: <defaults>
</compile_context>

<pallas_src>
import functools

import jax
import jax.numpy as jnp
import numpy as np
from jax.experimental import pallas as pl
from jax.experimental.pallas import tpu as pltpu


# ---------------------------------------------------------------------------
# Pallas kernel: fused (Wt @ Xt) + bias + activation, lane-dense output
# ---------------------------------------------------------------------------
def _matmul_bias_act_kernel(wt_ref, xt_ref, b_ref, o_ref, *, activation,
                            negative_slope):
    # [N, K] @ [K, tm] -> [N, tm]; f32 accumulation on the MXU, f32 epilogue on
    # the VPU (hidden under the streaming DMAs), single lane-dense store.
    acc = jnp.dot(wt_ref[...], xt_ref[...], preferred_element_type=jnp.float32)
    acc = acc + b_ref[...]                      # (N, 1) broadcasts along lanes
    if activation == "relu":
        acc = jnp.maximum(acc, 0.0)
    elif activation == "lrelu":
        acc = jnp.where(acc >= 0.0, acc, negative_slope * acc)
    # else: identity
    o_ref[...] = acc.astype(o_ref.dtype)


# ---------------------------------------------------------------------------
# Tiling / VMEM planning
# ---------------------------------------------------------------------------
def _streamed_vmem_budget_bytes(default_bytes=16 * 1024 * 1024):
    """VMEM budget for the *streamed* (double-buffered) blocks only.

    Kept at <=16 MiB on every generation (v7x has only 64 MiB per TensorCore,
    v5e's scoped default is 16 MiB); pltpu.get_tpu_info() only ever shrinks it.
    """
    try:
        phys = int(pltpu.get_tpu_info().vmem_capacity_bytes)
        return int(min(default_bytes, max(4 * 1024 * 1024, phys // 4)))
    except Exception:           # hardware query unavailable -> fixed budget
        return default_bytes


def _plan_lane_tiling(M, K, N, in_bytes, out_bytes, budget_bytes,
                      min_tile=512, target_steps=8):
    """Pick (lane_tile, num_grid_steps) for the streamed M (lane) axis.

    Rules (per perf review):
      * tile >= 512 lanes (below that, per-step overhead + tiny DMAs dominate),
      * prefer a 128-multiple divisor of M (no padding, no masking),
      * aim for 4-8 grid steps per chip so both v7x TensorCores get a
        pipelined stream of blocks,
      * non-divisible fallback uses a bounds-masked ragged last block
        (grid = cdiv) instead of an extra jnp.pad pass over HBM.
    """
    per_lane = 2 * (K * in_bytes + N * out_bytes)     # double-buffered in + out
    cap = (budget_bytes // per_lane) // 128 * 128
    cap = max(128, min(8192, cap))
    floor = min(min_tile, cap)

    if M <= max(floor, 128):
        return M, 1                     # single full-M block: always legal

    # Largest 128-multiple divisor of M in [floor, cap].
    tm = None
    hi = min(cap, (M // 128) * 128)
    for cand in range(hi, floor - 1, -128):
        if M % cand == 0:
            tm = cand
            break

    if tm is None:
        if M <= cap:
            return M, 1                 # full-M block (no 128 constraint)
        # Ragged tail: last block partially out of bounds; Pallas bounds-masks
        # the partial load/store, so no input pad and no output slice copy.
        tm = cap
        return tm, pl.cdiv(M, tm)

    # Enough steps to keep both v7x TensorCores pipelined, never below the
    # 512-lane floor.
    while (M // tm) < target_steps and tm % 256 == 0 and (tm // 2) >= floor:
        tm //= 2
    return tm, M // tm


# ---------------------------------------------------------------------------
# Fused  act(Wt @ Xt + bias)  wrapper
# ---------------------------------------------------------------------------
def fused_matmul_bias_act_T(wt, xt, bias, *, activation="lrelu",
                            negative_slope=0.1, out_dtype=jnp.float32,
                            vmem_budget_bytes=None):
    """act(wt @ xt + bias[:, None]) with a lane-dense Pallas TPU kernel.

    wt   : [N, K]  conv weight; grid-invariant block, resident in VMEM
    xt   : [K, M]  activations, streamed along M (the lane axis)
    bias : [N]     kept in f32 for the epilogue
    returns [N, M] in out_dtype.
    """
    N, K = wt.shape
    K2, M = xt.shape
    assert K == K2

    in_bytes = xt.dtype.itemsize
    out_bytes = jnp.dtype(out_dtype).itemsize
    if vmem_budget_bytes is None:
        vmem_budget_bytes = _streamed_vmem_budget_bytes()

    tm, steps = _plan_lane_tiling(M, K, N, in_bytes, out_bytes,
                                  vmem_budget_bytes)
    grid = (steps,)

    # Explicit scoped-VMEM limit: double-buffered streamed blocks + the
    # grid-invariant (but pipeline-double-buffered) weight/bias + slack.
    streamed_bytes = 2 * tm * (K * in_bytes + N * out_bytes)
    resident_bytes = 2 * (N * K * wt.dtype.itemsize + N * 4)
    vmem_limit = int(1.25 * (streamed_bytes + resident_bytes)) + (2 << 20)
    vmem_limit = max(8 << 20, min(vmem_limit, 64 << 20))

    kernel = functools.partial(_matmul_bias_act_kernel,
                               activation=activation,
                               negative_slope=negative_slope)
    cost = pl.CostEstimate(
        flops=2 * M * K * N,
        transcendentals=0,
        bytes_accessed=K * M * in_bytes + N * M * out_bytes
        + N * K * wt.dtype.itemsize + N * 4)

    bias_col = bias.astype(jnp.float32).reshape(N, 1)

    return pl.pallas_call(
        kernel,
        out_shape=jax.ShapeDtypeStruct((N, M), out_dtype),
        grid_spec=pltpu.PrefetchScalarGridSpec(
            num_scalar_prefetch=0,
            grid=grid,
            in_specs=[
                pl.BlockSpec((N, K), lambda i: (0, 0)),    # weight: fetched once
                pl.BlockSpec((K, tm), lambda i: (0, i)),   # activations: streamed
                pl.BlockSpec((N, 1), lambda i: (0, 0)),    # bias: fetched once
            ],
            out_specs=pl.BlockSpec((N, tm), lambda i: (0, i)),  # lane-dense store
        ),
        compiler_params=pltpu.CompilerParams(
            dimension_semantics=("parallel",),
            vmem_limit_bytes=vmem_limit,
            # Let XLA fold the (cast + angular-gather transpose) producer of
            # xt into this call's operand instead of materialising the [K, M]
            # intermediate with a standalone HBM relayout pass.
            allow_input_fusion=[False, True, False],
        ),
        cost_estimate=cost,
    )(wt, xt, bias_col)


# ---------------------------------------------------------------------------
# BottleNeck forward (wrapper: layout glue in plain JAX, compute in Pallas)
# ---------------------------------------------------------------------------
def bottleneck_forward(x, conv_weight, conv_bias, *, ang_res, upscale_factor,
                       activation="lrelu", negative_slope=0.1,
                       io_dtype=jnp.bfloat16, out_dtype=None,
                       vmem_budget_bytes=None):
    """
    x           : [B, C, A*H, A*W]   MacPI light field
    conv_weight : [S^2*A^2, C, A, A] torch-conv-style weight of the (A,A,1,1) kernel
    conv_bias   : [S^2*A^2]
    io_dtype    : streaming dtype of the matmul operands.  Default bf16 on ALL
                  generations (the op is HBM-bound; v5e benefits most); the MXU
                  accumulates and the epilogue runs in f32.  Pass None for a
                  bit-tight match with the f32 reference.
    out_dtype   : dtype of the kernel output and the pixel-shuffle relayout
                  (default: x.dtype).  Pass jnp.bfloat16 when downstream
                  tolerates it to halve the output-side HBM traffic.
    returns     : [B, 1, A*S*H, A*S*W]  MacPI of the spatially-upscaled LF

    NOTE: negative_slope defaults to 0.1 (DimNet-style LeakyReLU); PyTorch's
    nn.LeakyReLU default is 0.01 — pass the model's slope to match exactly.
    """
    A, S = ang_res, upscale_factor
    B, C, HA, WA = x.shape
    assert HA % A == 0 and WA % A == 0
    H, W = HA // A, WA // A
    N = S * S * A * A
    K = C * A * A
    M = B * H * W

    if out_dtype is None:
        out_dtype = x.dtype

    # 1. Padder(receptive_field - 1) = Padder(0): identity for BottleNeck.

    # 2a. Angular gather into the matmul layout:
    #     Xt[(c,u,v), (b,h,w)] = x[b, c, h*A + u, w*A + v]
    #     Cast to the streaming dtype BEFORE the relayout (half the bytes if
    #     the transpose does not fuse), and allow_input_fusion on the
    #     pallas_call lets XLA fold this producer into the kernel operand.
    # TODO(synk): fully fuse this gather into the kernel (in-VMEM A-strided
    # lane de-interleave of native MacPI rows); that relayout still does not
    # lower reliably in Mosaic, so it stays on the XLA side for now.
    if io_dtype is not None:
        x = x.astype(io_dtype)
    xt = jnp.transpose(x.reshape(B, C, H, A, W, A),
                       (1, 3, 5, 0, 2, 4)).reshape(K, M)
    wt = conv_weight.reshape(N, K)          # free reshape — no transpose needed
    if io_dtype is not None:
        wt = wt.astype(io_dtype)

    # 2b. ConvKernel as a fused lane-dense matmul + bias + activation (Pallas).
    yt = fused_matmul_bias_act_T(wt, xt, conv_bias,
                                 activation=activation,
                                 negative_slope=negative_slope,
                                 out_dtype=out_dtype,
                                 vmem_budget_bytes=vmem_budget_bytes)    # [N, M]

    # 3+4. PixelShuffle(A, 'ang') then PixelShuffle(S, 'spa'):
    #   out[b, 0, (h*S+i)*A+u, (w*S+j)*A+v] = yt[((i*S+j)*A+u)*A+v, (b,h,w)]
    # TODO(synk): emit this layout directly from the kernel (grouped strided
    # stores of the small SxA factors) to drop one more HBM pass; until then
    # out_dtype=bf16 halves the traffic of this relayout.
    y = yt.reshape(S, S, A, A, B, H, W)            # i, j, u, v, b, h, w
    y = jnp.transpose(y, (4, 5, 0, 2, 6, 1, 3))    # b, h, i, u, w, j, v
    return y.reshape(B, 1, H * S * A, W * S * A)


# ---------------------------------------------------------------------------
# Pure-JAX reference (for correctness check)
# ---------------------------------------------------------------------------
def bottleneck_reference(x, conv_weight, conv_bias, *, ang_res, upscale_factor,
                         activation="lrelu", negative_slope=0.1):
    A, S = ang_res, upscale_factor
    B, C, HA, WA = x.shape
    H, W = HA // A, WA // A
    N = S * S * A * A
    K = C * A * A
    x6 = jnp.transpose(x.reshape(B, C, H, A, W, A), (0, 2, 4, 1, 3, 5))
    X = x6.reshape(B * H * W, K)
    Y = X @ conv_weight.reshape(N, K).T + conv_bias[None, :]
    if activation == "relu":
        Y = jnp.maximum(Y, 0.0)
    elif activation == "lrelu":
        Y = jnp.where(Y >= 0.0, Y, negative_slope * Y)
    y = jnp.transpose(Y.reshape(B, H, W, S, S, A, A), (0, 1, 3, 5, 2, 4, 6))
    return y.reshape(B, 1, H * S * A, W * S * A)


# ---------------------------------------------------------------------------
if __name__ == "__main__":
    # Module hyper-params (small, consistent with BottleNeck.__init__)
    ang_res = 2          # A
    channels = 4         # C
    upscale_factor = 2   # S
    activation = "lrelu"

    B, H, W = 2, 8, 8
    A, C, S = ang_res, channels, upscale_factor
    N_out = S * S * A * A

    key = jax.random.PRNGKey(0)
    kx, kw, kb = jax.random.split(key, 3)

    # Input MacPI light field: [B, C, A*H, A*W] = [2, 4, 16, 16]
    x = jax.random.normal(kx, (B, C, A * H, A * W), dtype=jnp.float32)

    # Deterministic conv parameters (kaiming-ish scale), torch conv layout.
    fan_in = C * A * A
    conv_weight = jax.random.normal(kw, (N_out, C, A, A), dtype=jnp.float32)
    conv_weight = conv_weight * (2.0 / fan_in) ** 0.5
    conv_bias = 0.01 * jax.random.normal(kb, (N_out,), dtype=jnp.float32)

    ref = bottleneck_reference(x, conv_weight, conv_bias,
                               ang_res=A, upscale_factor=S,
                               activation=activation)

    # 1) f32 streaming path: tight agreement with the f32 reference.
    fwd_f32 = jax.jit(functools.partial(bottleneck_forward,
                                        ang_res=A, upscale_factor=S,
                                        activation=activation,
                                        io_dtype=None))
    out_f32 = jax.block_until_ready(fwd_f32(x, conv_weight, conv_bias))
    assert out_f32.shape == (B, 1, A * S * H, A * S * W), out_f32.shape
    assert np.allclose(np.asarray(out_f32), np.asarray(ref),
                       atol=2e-4, rtol=2e-4)

    # 2) Default bf16-streaming path (f32 accumulate/epilogue) with bf16
    #    output + shuffle: relaxed tolerance (operand/output rounding).
    fwd_bf16 = jax.jit(functools.partial(bottleneck_forward,
                                         ang_res=A, upscale_factor=S,
                                         activation=activation,
                                         io_dtype=jnp.bfloat16,
                                         out_dtype=jnp.bfloat16))
    out_bf16 = jax.block_until_ready(fwd_bf16(x, conv_weight, conv_bias))
    assert out_bf16.shape == (B, 1, A * S * H, A * S * W), out_bf16.shape
    assert np.allclose(np.asarray(out_bf16, dtype=np.float32), np.asarray(ref),
                       atol=5e-2, rtol=5e-2)

    print("KERNEL_OK")
</pallas_src>

<mosaic_0001>
module attributes {stable_mosaic.version = 11 : i64} {
  func.func @_matmul_bias_act_kernel(%arg0: i32, %arg1: memref<16x16xf32, #tpu.memory_space<vmem>>, %arg2: memref<16x128xf32, #tpu.memory_space<vmem>>, %arg3: memref<16x1xf32, #tpu.memory_space<vmem>>, %arg4: memref<16x128xf32, #tpu.memory_space<vmem>>) attributes {dimension_semantics = [#tpu.dimension_semantics<parallel>], iteration_bounds = array<i64: 1>, scalar_prefetch = 0 : i64, scratch_operands = 0 : i64, tpu.core_type = #tpu.core_type<tc>, window_params = [{pipeline_mode = #tpu.pipeline_mode<synchronous>, transform_indices = @transform_0, window_bounds = array<i64: 16, 16>}, {transform_indices = @transform_1, window_bounds = array<i64: 16, 128>}, {pipeline_mode = #tpu.pipeline_mode<synchronous>, transform_indices = @transform_2, window_bounds = array<i64: 16, 1>}, {transform_indices = @transform_3, window_bounds = array<i64: 16, 128>}]} {
    %c0 = arith.constant 0 : index
    %c0_0 = arith.constant 0 : index
    %0 = vector.load %arg1[%c0, %c0_0] : memref<16x16xf32, #tpu.memory_space<vmem>>, vector<16x16xf32>
    %c0_1 = arith.constant 0 : index
    %c0_2 = arith.constant 0 : index
    %1 = vector.load %arg2[%c0_1, %c0_2] : memref<16x128xf32, #tpu.memory_space<vmem>>, vector<16x128xf32>
    %cst = arith.constant dense<0.000000e+00> : vector<16x128xf32>
    %2 = tpu.matmul %0, %1, %cst {dimension_numbers = #tpu.dot_dimension_numbers<[1], [0], [0], [1], [0, 0, 1, 1], [], []>} : vector<16x16xf32>, vector<16x128xf32>, vector<16x128xf32> -> vector<16x128xf32>
    %c0_3 = arith.constant 0 : index
    %c0_4 = arith.constant 0 : index
    %3 = vector.load %arg3[%c0_3, %c0_4] : memref<16x1xf32, #tpu.memory_space<vmem>>, vector<16x1xf32>
    %4 = vector.broadcast %3 : vector<16x1xf32> to vector<16x128xf32>
    %5 = arith.addf %2, %4 : vector<16x128xf32>
    %cst_5 = arith.constant 0.000000e+00 : f32
    %6 = vector.broadcast %cst_5 : f32 to vector<16x128xf32>
    %7 = arith.cmpf oge, %5, %6 : vector<16x128xf32>
    %cst_6 = arith.constant 1.000000e-01 : f32
    %8 = vector.broadcast %cst_6 : f32 to vector<16x128xf32>
    %9 = arith.mulf %8, %5 : vector<16x128xf32>
    %10 = arith.select %7, %5, %9 : vector<16x128xi1>, vector<16x128xf32>
    %c0_7 = arith.constant 0 : index
    %c0_8 = arith.constant 0 : index
    %11 = vector.load %arg4[%c0_7, %c0_8] : memref<16x128xf32, #tpu.memory_space<vmem>>, vector<16x128xf32>
    tpu.vector_store %arg4[%c0_7, %c0_8], %10 {strides = array<i32>} : memref<16x128xf32, #tpu.memory_space<vmem>>, vector<16x128xf32>,
    return
  }
  func.func @transform_0(%arg0: i32) -> (i32, i32) {
    %c0_i32 = arith.constant 0 : i32
    %c0_i32_0 = arith.constant 0 : i32
    %c0_i32_1 = arith.constant 0 : i32
    return %c0_i32, %c0_i32_0 : i32, i32
  }
  func.func @transform_1(%arg0: i32) -> (i32, i32) {
    %c0_i32 = arith.constant 0 : i32
    %c0_i32_0 = arith.constant 0 : i32
    return %c0_i32, %arg0 : i32, i32
  }
  func.func @transform_2(%arg0: i32) -> (i32, i32) {
    %c0_i32 = arith.constant 0 : i32
    %c0_i32_0 = arith.constant 0 : i32
    %c0_i32_1 = arith.constant 0 : i32
    return %c0_i32, %c0_i32_0 : i32, i32
  }
  func.func @transform_3(%arg0: i32) -> (i32, i32) {
    %c0_i32 = arith.constant 0 : i32
    %c0_i32_0 = arith.constant 0 : i32
    return %c0_i32, %arg0 : i32, i32
  }
}

</mosaic_0001>

<llo_original>
// kernel: bottleneck_forward.1
$region0: #{bottleneck_forward.1}
  #allocation0 [shape = 'u32[]', space=smem, size = 0x4, offset = 0x4, fixed_abs, tag = 'smem constant byte address 0x4 - core index']
  #allocation1 [shape = 'u32[144,128]{1,0:T(1,128)}', space=vmem, size = 0x12000, scoped, tag = 'internal scratch']
  %s0 = inlined_call_operand.vmem [shape: f32[16,16], index: 0, kind: input, shape index: {}]
  %s1 = inlined_call_operand.vmem [shape: f32[16,128], index: 1, kind: input, shape index: {}]
  %s2 = inlined_call_operand.vmem [shape: f32[16,1], index: 2, kind: input, shape index: {}]
  %s3 = inlined_call_operand.vmem [shape: f32[16,128], index: 3, kind: output, shape index: {}]
  %s4 = sld [smem:[#allocation0]]
  $region22: #{bottleneck_forward.1} parent=0
    _
  %s6 = ssub.s32 1, %s4
  %s7 = scalar_select 0, %s6, %s4
  // Predicated region
  $region2: #{bottleneck_forward.1} parent=0 // pred_check
    _
  $region3: #{bottleneck_forward.1} parent=0 // pred_check_branch
    %9 = sbr.rel (0) target = $region5
  $region4: #{bottleneck_forward.1} parent=0 // pred_region
    _
  $region5: #{bottleneck_forward.1} parent=0 // pred_fallthru
    _
  // Predicated region
  $region6: #{bottleneck_forward.1} parent=0 // pred_check
    _
  $region7: #{bottleneck_forward.1} parent=0 // pred_check_branch
    %11 = sbr.rel (0) target = $region9
  $region8: #{bottleneck_forward.1} parent=0 // pred_region
    _
  $region9: #{bottleneck_forward.1} parent=0 // pred_fallthru
    _
  // Predicated region
  $region10: #{bottleneck_forward.1} parent=0 // pred_check
    _
  $region11: #{bottleneck_forward.1} parent=0 // pred_check_branch
    %13 = sbr.rel (0) target = $region13
  $region12: #{bottleneck_forward.1} parent=0 // pred_region
    _
  $region13: #{bottleneck_forward.1} parent=0 // pred_fallthru
    _
  %v14 = vld [vmem:[%s0] sm:$0xff]
  %v15 = vld [vmem:[%s0 + $0x8] sm:$0xff]
  %v16 = vld [vmem:[%s1] sm:$0xff]
  %v17 = vld [vmem:[%s1 + $0x8] sm:$0xff]
  %v18 = vld [vmem:[%s2] sm:$0xff]
  %v19 = vld [vmem:[%s2 + $0x8] sm:$0xff]
  %21 = vset.pattern.permute.xlu0 0
  %22 = vperm.xlu0 %21, %v18
  %v23 = vpop.permute.xlu0 %22
  %26 = vset.pattern.permute.xlu0 0
  %27 = vperm.xlu0 %26, %v19
  %v28 = vpop.permute.xlu0 %27
  %vm30 = vcmask 130048
  %v32 = vsel %vm30, %v14, 0
  %v35 = vsel %vm30, %v15, 0
  %37 = vmatprep.subr.mxu0 0.0
  %38 = vmatpush1.msra.mxu0 %v16
  %39 = vmatprep.subr.mxu0 0.0
  %40 = vmatpush1.msra.mxu0 %v17
  %41 = vmatprep.subr.mxu0 0.0
  %42 = vmatpush1.msra.mxu0 0.0
  %43 = vmatprep.subr.mxu0 0.0
  %44 = vmatpush1.msra.mxu0 0.0
  %45 = vmatprep.subr.mxu0 0.0
  %46 = vmatpush1.msra.mxu0 0.0
  %47 = vmatprep.subr.mxu0 0.0
  %48 = vmatpush1.msra.mxu0 0.0
  %49 = vmatprep.subr.mxu0 0.0
  %50 = vmatpush1.msra.mxu0 0.0
  %51 = vmatprep.subr.mxu0 0.0
  %52 = vmatpush1.msra.mxu0 0.0
  %53 = vmatprep.subr.mxu0 0.0
  %54 = vmatpush1.msra.mxu0 0.0
  %55 = vmatprep.subr.mxu0 0.0
  %56 = vmatpush1.msra.mxu0 0.0
  %57 = vmatprep.subr.mxu0 0.0
  %58 = vmatpush1.msra.mxu0 0.0
  %59 = vmatprep.subr.mxu0 0.0
  %60 = vmatpush1.msra.mxu0 0.0
  %61 = vmatprep.subr.mxu0 0.0
  %62 = vmatpush1.msra.mxu0 0.0
  %63 = vmatprep.subr.mxu0 0.0
  %64 = vmatpush1.msra.mxu0 0.0
  %65 = vmatprep.subr.mxu0 0.0
  %66 = vmatpush1.msra.mxu0 0.0
  %67 = vmatprep.subr.mxu0 0.0
  %68 = vmatpush1.msra.mxu0 0.0
  %69 = vmatprep.subr.mxu0 0.0
  %70 = vmatpush1.msra.mxu0 0.0
  %71 = vmatprep.subr.mxu0 0.0
  %72 = vmatpush1.msra.mxu0 0.0
  %73 = vmatprep.subr.mxu0 0.0
  %74 = vmatpush1.msra.mxu0 0.0
  %75 = vmatprep.subr.mxu0 0.0
  %76 = vmatpush1.msra.mxu0 0.0
  %77 = vmatprep.subr.mxu0 0.0
  %78 = vmatpush1.msra.mxu0 0.0
  %79 = vmatprep.subr.mxu0 0.0
  %80 = vmatpush1.msra.mxu0 0.0
  %81 = vmatprep.subr.mxu0 0.0
  %82 = vmatpush1.msra.mxu0 0.0
  %83 = vmatprep.subr.mxu0 0.0
  %84 = vmatpush1.msra.mxu0 0.0
  %85 = vmatprep.subr.mxu0 0.0
  %86 = vmatpush1.msra.mxu0 0.0
  %87 = vmatprep.subr.mxu0 0.0
  %88 = vmatpush1.msra.mxu0 0.0
  %89 = vmatprep.subr.mxu0 0.0
  %90 = vmatpush1.msra.mxu0 0.0
  %91 = vmatprep.subr.mxu0 0.0
  %92 = vmatpush1.msra.mxu0 0.0
  %93 = vmatprep.subr.mxu0 0.0
  %94 = vmatpush1.msra.mxu0 0.0
  %95 = vmatprep.subr.mxu0 0.0
  %96 = vmatpush1.msra.mxu0 0.0
  %97 = vmatprep.subr.mxu0 0.0
  %98 = vmatpush1.msra.mxu0 0.0
  %99 = vmatprep.subr.mxu0 0.0
  %100 = vmatpush1.msra.mxu0 0.0
  %101 = vmatprep.mubr.f32.mxu0 0.0
  %102 = vmatmul.mubr.f32.gmra.mrb[0].mxu0 %v32
  %v103 = vpop.f32.mrb[0].mxu0
  %v104 = vadd.f32 %v23, %v103
  %v105 = vpop.f32.mrb[0].mxu0
  %106 = vmatprep.mubr.f32.mxu0 0.0
  %107 = vmatmul.mubr.f32.gmra.mrb[0].mxu0 %v35
  %v108 = vpop.f32.mrb[0].mxu0
  %v109 = vadd.f32 %v28, %v108
  %v110 = vpop.f32.mrb[0].mxu0
  %111 = vdwg.mxu0
  %vm112 = vcmp.ge.f32.partialorder %v104, 0.0
  %vm113 = vcmp.ge.f32.partialorder %v109, 0.0
  %v114 = vmul.f32 %v104, 0.1
  %v115 = vmul.f32 %v109, 0.1
  %v116 = vsel %vm112, %v104, %v114
  %v117 = vsel %vm113, %v109, %v115
  %118 = vst [vmem:[%s3] sm:$0xff] %v116
  %119 = vst [vmem:[%s3 + $0x8] sm:$0xff] %v117
  // Predicated region
  $region14: #{bottleneck_forward.1} parent=0 // pred_check
    _
  $region15: #{bottleneck_forward.1} parent=0 // pred_check_branch
    %121 = sbr.rel (0) target = $region17
  $region16: #{bottleneck_forward.1} parent=0 // pred_region
    _
  $region17: #{bottleneck_forward.1} parent=0 // pred_fallthru
    _
  // Predicated region
  $region18: #{bottleneck_forward.1} parent=0 // pred_check
    _
  $region19: #{bottleneck_forward.1} parent=0 // pred_check_branch
    %123 = sbr.rel (0) target = $region21
  $region20: #{bottleneck_forward.1} parent=0 // pred_region
    _
  $region21: #{bottleneck_forward.1} parent=0 // pred_fallthru
    _

</llo_original>
